<compile_context>
chip_gen: v7x
topology: tpu7x:2x2x1
jax: 0.10.0
libtpu: 0.0.40
codegen_flags: <defaults>
</compile_context>

<pallas_src>
import functools

import jax
import jax.numpy as jnp
from jax.experimental import pallas as pl
from jax.experimental.pallas import tpu as pltpu


def _weighted_l1_kernel(x_ref, y_ref, w_ref, o_ref, acc_ref, *, rows_total):
    # x_ref, y_ref : (TR, TS) tile (native input dtype, upcast in-kernel)
    # w_ref        : (TR, 1)  per-row weight already scaled by 1/(S*R)
    # o_ref        : (1, 1, 128) per-row-block partial sum (value lives in lane 0)
    # acc_ref      : (TR, 1) f32 scratch accumulator, persists across the j axis
    i = pl.program_id(0)            # row-block axis   ("parallel")
    j = pl.program_id(1)            # spatial-chunk axis ("arbitrary" reduction)
    n_j = pl.num_programs(1)
    tr = x_ref.shape[0]

    @pl.when(j == 0)
    def _():
        acc_ref[...] = jnp.zeros_like(acc_ref)

    # Upcast inside the kernel: HBM traffic stays at the native dtype (e.g. bf16).
    diff = jnp.abs(x_ref[...].astype(jnp.float32) - y_ref[...].astype(jnp.float32))
    row_sums = jnp.sum(diff, axis=-1, keepdims=True)            # (TR, 1)

    # Mask rows past the real R: the last row block may be partial and its
    # fill (and the matching weight rows) is undefined -> never multiply it in.
    row_ids = i * tr + jax.lax.broadcasted_iota(jnp.int32, (tr, 1), 0)
    valid = row_ids < rows_total
    acc_ref[...] += jnp.where(valid, row_sums * w_ref[...], 0.0)

    @pl.when(j == n_j - 1)
    def _():
        total = jnp.sum(acc_ref[...])
        lane = jax.lax.broadcasted_iota(jnp.int32, o_ref.shape, 2)
        o_ref[...] = jnp.where(lane == 0, total, 0.0)


def _vmem_capacity_bytes():
    try:
        return int(pltpu.get_tpu_info().vmem_capacity_bytes)
    except Exception:
        return 64 * 1024 * 1024          # conservative default (v7x per-TC VMEM)


def weighted_l1_loss(x, y, weights):
    """x, y: (N, C, H, W); weights: (C,) -> scalar float32."""
    N, C, H, W = x.shape
    R = N * C
    S = H * W

    # Pure reshapes: no HBM copies, no wrapper-side dtype casts.
    xf = x.reshape(R, S)
    yf = y.reshape(R, S)

    # Fold 1/S (spatial mean) and 1/R (final mean over N*C) into per-row weights.
    w_row = jnp.broadcast_to(jnp.asarray(weights, jnp.float32), (N, C)).reshape(R)
    wf = (w_row / float(S * R)).reshape(R, 1)

    # ---- tile selection (sized per-generation from VMEM capacity) ----------
    # Lane tile: whole row when small, otherwise a 128-multiple divisor of S.
    MAX_TS = 2048
    TS = S
    if S > MAX_TS:
        for cand in (2048, 1792, 1536, 1280, 1024, 896, 768, 640, 512, 384, 256, 128):
            if S % cand == 0:
                TS = cand
                break
        # TODO(synk): if S > 2048 has no 128-multiple divisor we keep TS = S
        # (one spatial chunk per row block); fine for realistic H*W values.
    nS = S // TS

    itemsize = max(jnp.dtype(x.dtype).itemsize, jnp.dtype(y.dtype).itemsize)
    vmem_cap = _vmem_capacity_bytes()
    # Keep 2 inputs x 2 pipeline buffers under ~40% of this generation's VMEM.
    per_tile_budget = (vmem_cap * 2 // 5) // 4
    TR = per_tile_budget // (TS * itemsize)
    TR = max(8, min(1024, (TR // 8) * 8))
    TR = min(TR, ((R + 7) // 8) * 8)
    nRb = (R + TR - 1) // TR

    needed = (4 * TR * TS * itemsize          # double-buffered x and y tiles
              + 2 * TR * 128 * 4              # weight tiles (lane-padded)
              + TR * 128 * 4                  # accumulator scratch (lane-padded)
              + (4 << 20))                    # slack for outputs / internals
    vmem_limit = int(min(max(needed, 32 << 20), vmem_cap))

    out = pl.pallas_call(
        functools.partial(_weighted_l1_kernel, rows_total=R),
        out_shape=jax.ShapeDtypeStruct((nRb, 1, 128), jnp.float32),
        grid_spec=pltpu.PrefetchScalarGridSpec(
            num_scalar_prefetch=0,
            grid=(nRb, nS),
            in_specs=[
                pl.BlockSpec((TR, TS), lambda i, j: (i, j)),
                pl.BlockSpec((TR, TS), lambda i, j: (i, j)),
                # j is the inner axis, so the weight tile is only (re)fetched
                # when the row block changes: effectively resident per block.
                pl.BlockSpec((TR, 1), lambda i, j: (i, 0)),
            ],
            out_specs=pl.BlockSpec((1, 1, 128), lambda i, j: (i, 0, 0)),
            scratch_shapes=[pltpu.VMEM((TR, 1), jnp.float32)],
        ),
        compiler_params=pltpu.CompilerParams(
            # Row blocks are independent -> megacore-parallel on v7x; the
            # spatial axis accumulates into the resident per-block output.
            dimension_semantics=("parallel", "arbitrary"),
            vmem_limit_bytes=vmem_limit,
        ),
    )(xf, yf, wf)

    # Each row block wrote its partial into lane 0; the rest is zero.
    return jnp.sum(out)


if __name__ == "__main__":
    key = jax.random.PRNGKey(0)
    kx, ky = jax.random.split(key)

    N, C, H, W = 2, 4, 16, 16
    x = jax.random.normal(kx, (N, C, H, W), dtype=jnp.float32)
    y = jax.random.normal(ky, (N, C, H, W), dtype=jnp.float32)

    # Deterministic per-channel weights (module __init__ takes `weights`).
    weights = jnp.linspace(0.5, 2.0, C, dtype=jnp.float32)

    loss = weighted_l1_loss(x, y, weights)
    jax.block_until_ready(loss)

    # Reference in plain JAX (mirrors the PyTorch module).
    ref = (jnp.abs(x - y).mean(axis=(2, 3)) * weights[None, :]).mean()
    assert jnp.allclose(loss, ref, rtol=1e-5, atol=1e-6), (loss, ref)

    print("KERNEL_OK")
</pallas_src>

<mosaic_0001>
module attributes {stable_mosaic.version = 11 : i64} {
  func.func @_weighted_l1_kernel(%arg0: i32, %arg1: i32, %arg2: memref<8x256xf32, #tpu.memory_space<vmem>>, %arg3: memref<8x256xf32, #tpu.memory_space<vmem>>, %arg4: memref<8x1xf32, #tpu.memory_space<vmem>>, %arg5: memref<1x1x128xf32, #tpu.memory_space<vmem>>, %arg6: memref<8x1xf32, #tpu.memory_space<vmem>>) attributes {dimension_semantics = [#tpu.dimension_semantics<parallel>, #tpu.dimension_semantics<arbitrary>], iteration_bounds = array<i64: 1, 1>, scalar_prefetch = 0 : i64, scratch_operands = 1 : i64, tpu.core_type = #tpu.core_type<tc>, window_params = [{transform_indices = @transform_0, window_bounds = array<i64: 8, 256>}, {transform_indices = @transform_1, window_bounds = array<i64: 8, 256>}, {transform_indices = @transform_2, window_bounds = array<i64: 8, 1>}, {transform_indices = @transform_3, window_bounds = array<i64: 1, 1, 128>}]} {
    %c0_i32 = arith.constant 0 : i32
    %0 = arith.cmpi eq, %arg1, %c0_i32 : i32
    %1 = arith.extui %0 : i1 to i32
    %c0_i32_0 = arith.constant 0 : i32
    %2 = arith.cmpi ne, %1, %c0_i32_0 : i32
    scf.if %2 {
      %cst_14 = arith.constant 0.000000e+00 : f32
      %25 = vector.broadcast %cst_14 : f32 to vector<8x1xf32>
      %c0_15 = arith.constant 0 : index
      %c0_16 = arith.constant 0 : index
      %26 = vector.load %arg6[%c0_15, %c0_16] : memref<8x1xf32, #tpu.memory_space<vmem>>, vector<8x1xf32>
      tpu.vector_store %arg6[%c0_15, %c0_16], %25 {strides = array<i32>} : memref<8x1xf32, #tpu.memory_space<vmem>>, vector<8x1xf32>,
    } else {
    }
    %c0 = arith.constant 0 : index
    %c0_1 = arith.constant 0 : index
    %3 = vector.load %arg2[%c0, %c0_1] : memref<8x256xf32, #tpu.memory_space<vmem>>, vector<8x256xf32>
    %c0_2 = arith.constant 0 : index
    %c0_3 = arith.constant 0 : index
    %4 = vector.load %arg3[%c0_2, %c0_3] : memref<8x256xf32, #tpu.memory_space<vmem>>, vector<8x256xf32>
    %5 = arith.subf %3, %4 : vector<8x256xf32>
    %6 = math.absf %5 : vector<8x256xf32>
    %cst = arith.constant dense<0.000000e+00> : vector<8xf32>
    %7 = vector.multi_reduction <add>, %6, %cst [1] : vector<8x256xf32> to vector<8xf32>
    %8 = vector.shape_cast %7 : vector<8xf32> to vector<8x1xf32>
    %c8_i32 = arith.constant 8 : i32
    %9 = arith.muli %arg0, %c8_i32 : i32
    %10 = tpu.iota {dimensions = array<i32: 0>} : vector<8x1xi32>
    %11 = vector.broadcast %9 : i32 to vector<8x1xi32>
    %12 = arith.addi %11, %10 : vector<8x1xi32>
    %c8_i32_4 = arith.constant 8 : i32
    %13 = vector.broadcast %c8_i32_4 : i32 to vector<8x1xi32>
    %14 = arith.cmpi slt, %12, %13 : vector<8x1xi32>
    %c0_5 = arith.constant 0 : index
    %c0_6 = arith.constant 0 : index
    %15 = vector.load %arg6[%c0_5, %c0_6] : memref<8x1xf32, #tpu.memory_space<vmem>>, vector<8x1xf32>
    %c0_7 = arith.constant 0 : index
    %c0_8 = arith.constant 0 : index
    %16 = vector.load %arg4[%c0_7, %c0_8] : memref<8x1xf32, #tpu.memory_space<vmem>>, vector<8x1xf32>
    %17 = arith.mulf %8, %16 : vector<8x1xf32>
    %cst_9 = arith.constant 0.000000e+00 : f32
    %18 = vector.broadcast %cst_9 : f32 to vector<8x1xf32>
    %19 = arith.select %14, %17, %18 : vector<8x1xi1>, vector<8x1xf32>
    %20 = arith.addf %15, %19 : vector<8x1xf32>
    %c0_10 = arith.constant 0 : index
    %c0_11 = arith.constant 0 : index
    %21 = vector.load %arg6[%c0_10, %c0_11] : memref<8x1xf32, #tpu.memory_space<vmem>>, vector<8x1xf32>
    tpu.vector_store %arg6[%c0_10, %c0_11], %20 {strides = array<i32>} : memref<8x1xf32, #tpu.memory_space<vmem>>, vector<8x1xf32>,
    %c0_i32_12 = arith.constant 0 : i32
    %22 = arith.cmpi eq, %arg1, %c0_i32_12 : i32
    %23 = arith.extui %22 : i1 to i32
    %c0_i32_13 = arith.constant 0 : i32
    %24 = arith.cmpi ne, %23, %c0_i32_13 : i32
    scf.if %24 {
      %c0_14 = arith.constant 0 : index
      %c0_15 = arith.constant 0 : index
      %25 = vector.load %arg6[%c0_14, %c0_15] : memref<8x1xf32, #tpu.memory_space<vmem>>, vector<8x1xf32>
      %26 = vector.shape_cast %25 : vector<8x1xf32> to vector<1x8x1xf32>
      %cst_16 = arith.constant dense<0.000000e+00> : vector<1xf32>
      %27 = vector.multi_reduction <add>, %26, %cst_16 [1, 2] : vector<1x8x1xf32> to vector<1xf32>
      %28 = vector.shape_cast %27 : vector<1xf32> to vector<1x1x1xf32>
      %29 = vector.extract %28[0, 0, 0] : f32 from vector<1x1x1xf32>
      %30 = tpu.iota {dimensions = array<i32: 2>} : vector<1x1x128xi32>
      %c0_i32_17 = arith.constant 0 : i32
      %31 = vector.broadcast %c0_i32_17 : i32 to vector<1x1x128xi32>
      %32 = arith.cmpi eq, %30, %31 : vector<1x1x128xi32>
      %cst_18 = arith.constant 0.000000e+00 : f32
      %33 = vector.broadcast %29 : f32 to vector<1x1x128xf32>
      %34 = vector.broadcast %cst_18 : f32 to vector<1x1x128xf32>
      %35 = arith.select %32, %33, %34 : vector<1x1x128xi1>, vector<1x1x128xf32>
      %c0_19 = arith.constant 0 : index
      %c0_20 = arith.constant 0 : index
      %c0_21 = arith.constant 0 : index
      %36 = vector.load %arg5[%c0_19, %c0_20, %c0_21] : memref<1x1x128xf32, #tpu.memory_space<vmem>>, vector<1x1x128xf32>
      tpu.vector_store %arg5[%c0_19, %c0_20, %c0_21], %35 {strides = array<i32>} : memref<1x1x128xf32, #tpu.memory_space<vmem>>, vector<1x1x128xf32>,
    } else {
    }
    return
  }
  func.func @transform_0(%arg0: i32, %arg1: i32) -> (i32, i32) {
    %c0_i32 = arith.constant 0 : i32
    return %arg0, %arg1 : i32, i32
  }
  func.func @transform_1(%arg0: i32, %arg1: i32) -> (i32, i32) {
    %c0_i32 = arith.constant 0 : i32
    return %arg0, %arg1 : i32, i32
  }
  func.func @transform_2(%arg0: i32, %arg1: i32) -> (i32, i32) {
    %c0_i32 = arith.constant 0 : i32
    %c0_i32_0 = arith.constant 0 : i32
    return %arg0, %c0_i32 : i32, i32
  }
  func.func @transform_3(%arg0: i32, %arg1: i32) -> (i32, i32, i32) {
    %c0_i32 = arith.constant 0 : i32
    %c0_i32_0 = arith.constant 0 : i32
    %c0_i32_1 = arith.constant 0 : i32
    return %arg0, %c0_i32, %c0_i32_0 : i32, i32, i32
  }
}

</mosaic_0001>

<llo_original>
// kernel: tpu_custom_call.1
$region0: #{tpu_custom_call.1}
  #allocation0 [shape = 'u32[]', space=smem, size = 0x4, offset = 0x4, fixed_abs, tag = 'smem constant byte address 0x4 - core index']
  #allocation1 [shape = 'u32[144,128]{1,0:T(1,128)}', space=vmem, size = 0x12000, scoped, tag = 'internal scratch']
  #allocation2 [shape = 'f32[8,1]{1,0:T(8,128)}', space=vmem, size = 0x1000, scoped, tag = 'scratch operand']
  %s0 = inlined_call_operand.hbm [shape: f32[8,256], index: 0, kind: input, shape index: {}]
  %s1 = inlined_call_operand.hbm [shape: f32[8,256], index: 1, kind: input, shape index: {}]
  %s2 = inlined_call_operand.vmem [shape: f32[8,1], index: 2, kind: input, shape index: {}]
  %s3 = inlined_call_operand.hbm [shape: f32[1,1,128], index: 3, kind: output, shape index: {}]
  %s4 = sld [smem:[#allocation0]]
  $region38: #{tpu_custom_call.1} parent=0
    _
  %s6 = ssub.s32 1, %s4
  %s7 = scalar_select 0, %s6, %s4
  $region1: #{tpu_custom_call.1} parent=0
    #allocation3 [shape = 'u8[8192]{0}', space=vmem, size = 0x2000, scoped, tag = 'input window, operand 0, single buffered']
    #allocation4 [shape = 's32[1]{0}', space=sflag, size = 0x4, scoped, tag = 'scoped memory for tpu_custom_call.1']
    #allocation5 [shape = 's32[1]{0}', space=sflag, size = 0x4, scoped, tag = 'scoped memory for tpu_custom_call.1']
    #allocation6 [shape = 'u8[8192]{0}', space=vmem, size = 0x2000, scoped, tag = 'input window, operand 1, single buffered']
    #allocation7 [shape = 's32[1]{0}', space=sflag, size = 0x4, scoped, tag = 'scoped memory for tpu_custom_call.1']
    #allocation8 [shape = 'u8[512]{0}', space=vmem, size = 0x400, scoped, tag = 'output window, operand 0, single buffered']
    %8 = vsyncpa [#allocation4], 0
    %9 = vsyncpa [#allocation7], 0
    %10 = vsyncpa [#allocation5], 0
    // Predicated region
    $region2: #{tpu_custom_call.1} parent=1 // pred_check
      _
    $region3: #{tpu_custom_call.1} parent=1 // pred_check_branch
      %12 = sbr.rel (0) target = $region5
    $region4: #{tpu_custom_call.1} parent=1 // pred_region
      %s14 = ssub.s32 256, 256
      %15 = vsyncadd [#allocation4], %s14
      %s17 = sshll.u32 [#allocation3], 4
      %s18 = int_to_ptr.vmem [resolvable:$true] %s17
      %20 = dma.hbm_to_vmem [thread:$0]  %s0, 256, %s18, [#allocation4]
    $region5: #{tpu_custom_call.1} parent=1 // pred_fallthru
      _
    // Predicated region
    $region6: #{tpu_custom_call.1} parent=1 // pred_check
      _
    $region7: #{tpu_custom_call.1} parent=1 // pred_check_branch
      %22 = sbr.rel (0) target = $region9
    $region8: #{tpu_custom_call.1} parent=1 // pred_region
      %s24 = ssub.s32 256, 256
      %25 = vsyncadd [#allocation7], %s24
      %s27 = sshll.u32 [#allocation6], 4
      %s28 = int_to_ptr.vmem [resolvable:$true] %s27
      %30 = dma.hbm_to_vmem [thread:$0]  %s1, 256, %s28, [#allocation7]
    $region9: #{tpu_custom_call.1} parent=1 // pred_fallthru
      _
    // Predicated region
    $region10: #{tpu_custom_call.1} parent=1 // pred_check
      _
    $region11: #{tpu_custom_call.1} parent=1 // pred_check_branch
      %32 = sbr.rel (0) target = $region13
    $region12: #{tpu_custom_call.1} parent=1 // pred_region
      _
    $region13: #{tpu_custom_call.1} parent=1 // pred_fallthru
      _
    // Predicated region
    $region14: #{tpu_custom_call.1} parent=1 // pred_check
      _
    $region15: #{tpu_custom_call.1} parent=1 // pred_check_branch
      %34 = sbr.rel (0) target = $region17
    $region16: #{tpu_custom_call.1} parent=1 // pred_region
      %35 = dma.done [#allocation4], 256
    $region17: #{tpu_custom_call.1} parent=1 // pred_fallthru
      _
    // Predicated region
    $region18: #{tpu_custom_call.1} parent=1 // pred_check
      _
    $region19: #{tpu_custom_call.1} parent=1 // pred_check_branch
      %37 = sbr.rel (0) target = $region21
    $region20: #{tpu_custom_call.1} parent=1 // pred_region
      %38 = dma.done [#allocation7], 256
    $region21: #{tpu_custom_call.1} parent=1 // pred_fallthru
      _
    %p39 = scmp.eq.s32.totalorder 0, 0
    // Predicated region
    $region22: #{tpu_custom_call.1} parent=1 // pred_check
      %p40 = pneg %p39
    $region23: #{tpu_custom_call.1} parent=1 // pred_check_branch
      %42 = sbr.rel (%p40) target = $region25
    $region24: #{tpu_custom_call.1} parent=1 // pred_region
      %vm43 = vcmask 7168
      %44 = vst.msk [vmem:[#allocation2] sm:$0xff] %vm43, 0.0
    $region25: #{tpu_custom_call.1} parent=1 // pred_fallthru
      _
    %v45 = vld [vmem:[#allocation3] sm:$0xff]
    %v46 = vld [vmem:[#allocation3 + $0x8] sm:$0xff]
    %v47 = vld [vmem:[#allocation6] sm:$0xff]
    %v48 = vld [vmem:[#allocation6 + $0x8] sm:$0xff]
    %v49 = vsub.f32 %v45, %v47
    %v50 = vsub.f32 %v46, %v48
    %v51 = vand.u32 2147483647, %v49
    %v52 = vand.u32 2147483647, %v50
    %v53 = vadd.f32 %v51, %v52
    %54 = vadd.xlane.f32.xlu0 %v53
    %v55 = vpop.xlane.xlu0 %54
    %s56 = smul.u32 0, 8
    %v57 = vlaneseq
    %v58 = vshrl.u32 %v57, 7
    %v59 = vstv %s56
    %v60 = vadd.s32 %v59, %v58
    %vm61 = vcmp.lt.s32.totalorder %v60, 8
    %v62 = vld [vmem:[#allocation2] sm:$0xff]
    %v63 = vld [vmem:[%s2] sm:$0xff]
    %v64 = vmul.f32 %v55, %v63
    %v65 = vsel %vm61, %v64, 0.0
    %v66 = vadd.f32 %v62, %v65
    %vm67 = vcmask 7168
    %68 = vst.msk [vmem:[#allocation2] sm:$0xff] %vm67, %v66
    // Predicated region
    $region26: #{tpu_custom_call.1} parent=1 // pred_check
      %p69 = pneg %p39
    $region27: #{tpu_custom_call.1} parent=1 // pred_check_branch
      %71 = sbr.rel (%p69) target = $region29
    $region28: #{tpu_custom_call.1} parent=1 // pred_region
      %v72 = vld [vmem:[#allocation2] sm:$0xff]
      %v73 = vsel %vm67, %v72, 0.0
      %74 = vadd.xlane.f32.xlu0 %v73
      %v75 = vpop.xlane.xlu0 %74
      %v76 = vrot.slane %v75, 4
      %v77 = vadd.f32 %v75, %v76
      %v78 = vrot.slane %v77, 2
      %v79 = vadd.f32 %v77, %v78
      %v80 = vrot.slane %v79, 1
      %v81 = vadd.f32 %v79, %v80
      %s82 = vtos %v81
      %v83 = vlaneseq
      %v84 = vand.u32 %v83, 127
      %vm85 = vcmp.eq.s32.totalorder %v84, 0
      %v86 = vstv %s82
      %v87 = vsel %vm85, %v86, 0.0
      %88 = vst [vmem:[#allocation8] sm:$0x1] %v87
    $region29: #{tpu_custom_call.1} parent=1 // pred_fallthru
      _
    // Predicated region
    $region30: #{tpu_custom_call.1} parent=1 // pred_check
      _
    $region31: #{tpu_custom_call.1} parent=1 // pred_check_branch
      %90 = sbr.rel (0) target = $region33
    $region32: #{tpu_custom_call.1} parent=1 // pred_region
      %s92 = ssub.s32 16, 16
      %93 = vsyncadd [#allocation5], %s92
      %s95 = sshll.u32 [#allocation8], 4
      %s96 = int_to_ptr.vmem [resolvable:$true] %s95
      %98 = dma.vmem_to_hbm [thread:$0]  %s96, 16, %s3, [#allocation5]
    $region33: #{tpu_custom_call.1} parent=1 // pred_fallthru
      _
    // Predicated region
    $region34: #{tpu_custom_call.1} parent=1 // pred_check
      _
    $region35: #{tpu_custom_call.1} parent=1 // pred_check_branch
      %100 = sbr.rel (0) target = $region37
    $region36: #{tpu_custom_call.1} parent=1 // pred_region
      %101 = dma.done [#allocation5], 16
    $region37: #{tpu_custom_call.1} parent=1 // pred_fallthru
      _
    %102 = vsyncpa [#allocation4], 1
    %103 = vsyncpa [#allocation7], 1
    %104 = vsyncpa [#allocation5], 1

</llo_original>
